<compile_context>
chip_gen: v7x
topology: tpu7x:2x2x1
jax: 0.10.0
libtpu: 0.0.40
codegen_flags: <defaults>
</compile_context>

<pallas_src>
import functools

import jax
import jax.numpy as jnp
from jax import lax
from jax.experimental import pallas as pl
from jax.experimental.pallas import tpu as pltpu


def _device_kind():
    try:
        return jax.devices()[0].device_kind.lower()
    except Exception:  # pragma: no cover
        return ""


_KIND = _device_kind()
# Chips with two TensorCores sharing one HBM (v7x, plus v3/v4 megacore):
_HAS_TWO_CORES = any(t in _KIND for t in ("v7", "v4", "v3"))
_IS_V5 = "v5" in _KIND


def _round_up(v, m):
    return -(-v // m) * m


def _head_kernel(x_ref, wd_ref, bd_ref, wo_ref, bo_ref, o_ref, *,
                 n_sub, sub_rows, tanh_dtype):
    # x_ref:  [TB, H]    CLS-token features for this batch tile
    # wd_ref: [H, H]     dense weight (y = x @ Wd + bd), VMEM-resident
    # bd_ref: [1, H]     f32
    # wo_ref: [H, Cp]    out_proj weight, zero-padded to Cp lanes, resident
    # bo_ref: [1, Cp]    f32
    # o_ref:  [TB, Cp]
    wd = wd_ref[...]
    wo = wo_ref[...]
    bd = bd_ref[...]          # f32, no per-step cast
    bo = bo_ref[...]          # f32, no per-step cast

    def sub_chunk(k, carry):
        r0 = pl.multiple_of(k * sub_rows, 8)
        x = x_ref[pl.ds(r0, sub_rows), :]
        # Cast is a no-op on the recommended bf16-activation path; kept so
        # f32-feature callers still hit the bf16 MXU.
        h = jnp.dot(x.astype(wd.dtype), wd,
                    preferred_element_type=jnp.float32)
        t = jnp.tanh((h + bd).astype(tanh_dtype))
        out = jnp.dot(t.astype(wo.dtype), wo,
                      preferred_element_type=jnp.float32)
        o_ref[pl.ds(r0, sub_rows), :] = (out + bo).astype(o_ref.dtype)
        return carry

    # Unrolled so the LLO scheduler can overlap MXU (matmuls) of one chunk
    # with the EUP (tanh) of another.
    lax.fori_loop(0, n_sub, sub_chunk, 0, unroll=True)


def prepare_head_params(wd, bd, wo, bo, *, param_dtype=jnp.bfloat16):
    """One-time parameter prep (hoisted out of the per-call hot path).

    wd: [H, H] (= PyTorch dense.weight.T), bd: [H],
    wo: [H, C] (= PyTorch out_proj.weight.T), bo: [C].
    Pads out_proj to a lane-dense multiple of 128 columns, casts weights to
    `param_dtype` (bf16 recommended), keeps biases in f32.
    """
    H, C = wo.shape
    Cp = max(128, _round_up(C, 128))
    wo_p = jnp.pad(wo, ((0, 0), (0, Cp - C))) if Cp != C else wo
    bo_p = jnp.pad(bo, ((0, Cp - C),)) if Cp != C else bo
    return {
        "wd": wd.astype(param_dtype),
        "bd": bd.reshape(1, H).astype(jnp.float32),
        "wo": wo_p.astype(param_dtype),
        "bo": bo_p.reshape(1, Cp).astype(jnp.float32),
        "num_classes": C,
    }


def bert_classification_head(features, params, *, tb=None):
    """features: [B, S, H] (pass bf16 for best perf); params from
    prepare_head_params().  Returns logits [B, C] in features.dtype."""
    B, S, H = features.shape
    wd, bd2, wo_p, bo2 = params["wd"], params["bd"], params["wo"], params["bo"]
    C = params["num_classes"]
    Cp = wo_p.shape[1]
    assert wd.shape == (H, H) and wo_p.shape[0] == H

    # ---- batch tile size (sublane-aligned: multiple of 8 or the full B) ----
    if tb is None:
        tb = min(B, 1024)
        # Dual-TC chips: keep >= 2 grid steps so "parallel" shards across cores.
        if _HAS_TWO_CORES and B >= 16:
            tb = min(tb, _round_up(pl.cdiv(B, 2), 8))
    tb = min(tb, B)
    if tb != B:
        tb = max(8, (tb // 8) * 8)
    grid = (pl.cdiv(B, tb),)

    # ---- intra-tile sub-chunking (overlap MXU and EUP) ----
    n_sub = 1
    for cand in (4, 2):
        if tb % (8 * cand) == 0 and tb // cand >= 64:
            n_sub = cand
            break
    sub_rows = tb // n_sub

    # tanh in bf16 only where the EUP supports it (v6e/v7x), never on v5e.
    tanh_dtype = (jnp.bfloat16
                  if (wd.dtype == jnp.bfloat16 and not _IS_V5)
                  else jnp.float32)

    # ---- CLS-token slice: fused into the x BlockSpec when H is lane-aligned.
    if H % 128 == 0 or S == 1:
        # Free reshape of a contiguous array; the block reads only the first
        # H lanes of each row == features[:, 0, :], straight from HBM.
        x_in = features.reshape(B, S * H)
        if S == 1:
            x_in = x_in.astype(wd.dtype)      # whole array is the CLS slab
    else:
        # Fallback for unaligned toy H: wrapper-side slice (+ dtype match).
        x_in = features[:, 0, :].astype(wd.dtype)
    x_spec = pl.BlockSpec((tb, H), lambda i: (i, 0))

    cost = pl.CostEstimate(
        flops=2 * B * H * H + 2 * B * H * Cp,
        transcendentals=B * H,
        bytes_accessed=(x_in.dtype.itemsize * B * H
                        + wd.dtype.itemsize * (H * H + H * Cp)
                        + bd2.dtype.itemsize * H + bo2.dtype.itemsize * Cp
                        + features.dtype.itemsize * B * Cp),
    )

    kernel = functools.partial(_head_kernel, n_sub=n_sub, sub_rows=sub_rows,
                               tanh_dtype=tanh_dtype)

    def _call(single_buffer_weights):
        res_kw = ({"pipeline_mode": pl.Buffered(1)}
                  if single_buffer_weights else {})
        in_specs = [
            x_spec,
            pl.BlockSpec((H, H), lambda i: (0, 0), **res_kw),   # resident
            pl.BlockSpec((1, H), lambda i: (0, 0), **res_kw),
            pl.BlockSpec((H, Cp), lambda i: (0, 0), **res_kw),
            pl.BlockSpec((1, Cp), lambda i: (0, 0), **res_kw),
        ]
        return pl.pallas_call(
            kernel,
            out_shape=jax.ShapeDtypeStruct((B, Cp), features.dtype),
            grid=grid,
            in_specs=in_specs,
            out_specs=pl.BlockSpec((tb, Cp), lambda i: (i, 0)),
            compiler_params=pltpu.CompilerParams(
                dimension_semantics=("parallel",)),
            cost_estimate=cost,
        )(x_in, wd, bd2, wo_p, bo2)

    try:
        out = _call(True)
    except Exception:
        # pipeline_mode=pl.Buffered(1) unsupported on this jax build; the
        # default double-buffered resident weights are still correct.
        out = _call(False)

    return out[:, :C]


if __name__ == "__main__":
    key = jax.random.PRNGKey(0)

    def make_inputs(B, S, H, C):
        ks = jax.random.split(jax.random.fold_in(key, B * 1000 + H), 5)
        features = jax.random.normal(ks[0], (B, S, H), dtype=jnp.float32)
        # PyTorch Linear stores W as [out, in]; pre-transposed here to [in, out].
        wd = jax.random.normal(ks[1], (H, H), dtype=jnp.float32) * 0.05
        bd = jax.random.normal(ks[2], (H,), dtype=jnp.float32) * 0.05
        wo = jax.random.normal(ks[3], (H, C), dtype=jnp.float32) * 0.05
        bo = jax.random.normal(ks[4], (C,), dtype=jnp.float32) * 0.05
        return features, wd, bd, wo, bo

    def run_case(B, S, H, C, *, tb, param_dtype, atol):
        features, wd, bd, wo, bo = make_inputs(B, S, H, C)
        params = prepare_head_params(wd, bd, wo, bo, param_dtype=param_dtype)
        feats = features.astype(param_dtype)

        out = bert_classification_head(feats, params, tb=tb)
        out = jax.block_until_ready(out)
        assert out.shape == (B, C)

        # Pure-JAX reference (eval-mode dropout = identity), computed from the
        # same-precision inputs the kernel sees, accumulated in f32.
        x = feats[:, 0, :].astype(jnp.float32)
        wdr = params["wd"].astype(jnp.float32)
        wor = params["wo"][:, :C].astype(jnp.float32)
        ref = jnp.tanh(x @ wdr + bd) @ wor + bo
        err = float(jnp.max(jnp.abs(out.astype(jnp.float32) - ref)))
        assert err <= atol, (B, S, H, C, err)

    # Exact-semantics check in f32 (fused CLS-slice path, multi-step grid).
    run_case(B=16, S=8, H=128, C=3, tb=8, param_dtype=jnp.float32, atol=1e-4)
    # bf16 fast path (recommended production config), sub-chunked large tile.
    run_case(B=128, S=4, H=128, C=3, tb=128, param_dtype=jnp.bfloat16, atol=3e-2)
    # Unaligned toy hidden size -> wrapper-side CLS-slice fallback, auto tile.
    run_case(B=8, S=8, H=32, C=3, tb=None, param_dtype=jnp.float32, atol=1e-4)

    print("KERNEL_OK")
</pallas_src>

<mosaic_0001>
module attributes {stable_mosaic.version = 11 : i64} {
  func.func @_head_kernel(%arg0: i32, %arg1: memref<8x128xf32, #tpu.memory_space<vmem>>, %arg2: memref<128x128xf32, #tpu.memory_space<vmem>>, %arg3: memref<1x128xf32, #tpu.memory_space<vmem>>, %arg4: memref<128x128xf32, #tpu.memory_space<vmem>>, %arg5: memref<1x128xf32, #tpu.memory_space<vmem>>, %arg6: memref<8x128xf32, #tpu.memory_space<vmem>>) attributes {dimension_semantics = [#tpu.dimension_semantics<parallel>], iteration_bounds = array<i64: 2>, scalar_prefetch = 0 : i64, scratch_operands = 0 : i64, tpu.core_type = #tpu.core_type<tc>, window_params = [{transform_indices = @transform_0, window_bounds = array<i64: 8, 128>}, {pipeline_mode = #tpu.pipeline_mode<synchronous>, transform_indices = @transform_1, window_bounds = array<i64: 128, 128>}, {pipeline_mode = #tpu.pipeline_mode<synchronous>, transform_indices = @transform_2, window_bounds = array<i64: 1, 128>}, {pipeline_mode = #tpu.pipeline_mode<synchronous>, transform_indices = @transform_3, window_bounds = array<i64: 128, 128>}, {pipeline_mode = #tpu.pipeline_mode<synchronous>, transform_indices = @transform_4, window_bounds = array<i64: 1, 128>}, {transform_indices = @transform_5, window_bounds = array<i64: 8, 128>}]} {
    %c0 = arith.constant 0 : index
    %c0_0 = arith.constant 0 : index
    %0 = vector.load %arg2[%c0, %c0_0] : memref<128x128xf32, #tpu.memory_space<vmem>>, vector<128x128xf32>
    %c0_1 = arith.constant 0 : index
    %c0_2 = arith.constant 0 : index
    %1 = vector.load %arg4[%c0_1, %c0_2] : memref<128x128xf32, #tpu.memory_space<vmem>>, vector<128x128xf32>
    %c0_3 = arith.constant 0 : index
    %c0_4 = arith.constant 0 : index
    %2 = vector.load %arg3[%c0_3, %c0_4] : memref<1x128xf32, #tpu.memory_space<vmem>>, vector<1x128xf32>
    %c0_5 = arith.constant 0 : index
    %c0_6 = arith.constant 0 : index
    %3 = vector.load %arg5[%c0_5, %c0_6] : memref<1x128xf32, #tpu.memory_space<vmem>>, vector<1x128xf32>
    %c0_i32 = arith.constant 0 : i32
    %c8_i32 = arith.constant 8 : i32
    %4 = arith.muli %c0_i32, %c8_i32 : i32
    %5 = tpu.assume_multiple %4, 8 : i32
    %6 = arith.index_cast %5 : i32 to index
    %c0_7 = arith.constant 0 : index
    %7 = vector.load %arg1[%6, %c0_7] : memref<8x128xf32, #tpu.memory_space<vmem>>, vector<8x128xf32>
    %cst = arith.constant dense<0.000000e+00> : vector<8x128xf32>
    %8 = tpu.matmul %7, %0, %cst {dimension_numbers = #tpu.dot_dimension_numbers<[1], [0], [0], [1], [0, 0, 1, 1], [], []>} : vector<8x128xf32>, vector<128x128xf32>, vector<8x128xf32> -> vector<8x128xf32>
    %9 = vector.broadcast %2 : vector<1x128xf32> to vector<8x128xf32>
    %10 = arith.addf %8, %9 : vector<8x128xf32>
    %11 = math.tanh %10 : vector<8x128xf32>
    %cst_8 = arith.constant dense<0.000000e+00> : vector<8x128xf32>
    %12 = tpu.matmul %11, %1, %cst_8 {dimension_numbers = #tpu.dot_dimension_numbers<[1], [0], [0], [1], [0, 0, 1, 1], [], []>} : vector<8x128xf32>, vector<128x128xf32>, vector<8x128xf32> -> vector<8x128xf32>
    %13 = vector.broadcast %3 : vector<1x128xf32> to vector<8x128xf32>
    %14 = arith.addf %12, %13 : vector<8x128xf32>
    %15 = arith.index_cast %5 : i32 to index
    %c0_9 = arith.constant 0 : index
    %16 = vector.load %arg6[%15, %c0_9] : memref<8x128xf32, #tpu.memory_space<vmem>>, vector<8x128xf32>
    tpu.vector_store %arg6[%15, %c0_9], %14 {strides = array<i32>} : memref<8x128xf32, #tpu.memory_space<vmem>>, vector<8x128xf32>,
    %c1_i32 = arith.constant 1 : i32
    return
  }
  func.func @transform_0(%arg0: i32) -> (i32, i32) {
    %c0_i32 = arith.constant 0 : i32
    %c0_i32_0 = arith.constant 0 : i32
    return %arg0, %c0_i32 : i32, i32
  }
  func.func @transform_1(%arg0: i32) -> (i32, i32) {
    %c0_i32 = arith.constant 0 : i32
    %c0_i32_0 = arith.constant 0 : i32
    %c0_i32_1 = arith.constant 0 : i32
    return %c0_i32, %c0_i32_0 : i32, i32
  }
  func.func @transform_2(%arg0: i32) -> (i32, i32) {
    %c0_i32 = arith.constant 0 : i32
    %c0_i32_0 = arith.constant 0 : i32
    %c0_i32_1 = arith.constant 0 : i32
    return %c0_i32, %c0_i32_0 : i32, i32
  }
  func.func @transform_3(%arg0: i32) -> (i32, i32) {
    %c0_i32 = arith.constant 0 : i32
    %c0_i32_0 = arith.constant 0 : i32
    %c0_i32_1 = arith.constant 0 : i32
    return %c0_i32, %c0_i32_0 : i32, i32
  }
  func.func @transform_4(%arg0: i32) -> (i32, i32) {
    %c0_i32 = arith.constant 0 : i32
    %c0_i32_0 = arith.constant 0 : i32
    %c0_i32_1 = arith.constant 0 : i32
    return %c0_i32, %c0_i32_0 : i32, i32
  }
  func.func @transform_5(%arg0: i32) -> (i32, i32) {
    %c0_i32 = arith.constant 0 : i32
    %c0_i32_0 = arith.constant 0 : i32
    return %arg0, %c0_i32 : i32, i32
  }
}

module attributes {stable_mosaic.version = 11 : i64} {
  func.func @_head_kernel(%arg0: i32, %arg1: memref<8x128xf32, #tpu.memory_space<vmem>>, %arg2: memref<128x128xf32, #tpu.memory_space<vmem>>, %arg3: memref<1x128xf32, #tpu.memory_space<vmem>>, %arg4: memref<128x128xf32, #tpu.memory_space<vmem>>, %arg5: memref<1x128xf32, #tpu.memory_space<vmem>>, %arg6: memref<8x128xf32, #tpu.memory_space<vmem>>) attributes {dimension_semantics = [#tpu.dimension_semantics<parallel>], iteration_bounds = array<i64: 2>, scalar_prefetch = 0 : i64, scratch_operands = 0 : i64, tpu.core_type = #tpu.core_type<tc>, window_params = [{transform_indices = @transform_0, window_bounds = array<i64: 8, 128>}, {pipeline_mode = #tpu.pipeline_mode<synchronous>, transform_indices = @transform_1, window_bounds = array<i64: 128, 128>}, {pipeline_mode = #tpu.pipeline_mode<synchronous>, transform_indices = @transform_2, window_bounds = array<i64: 1, 128>}, {pipeline_mode = #tpu.pipeline_mode<synchronous>, transform_indices = @transform_3, window_bounds = array<i64: 128, 128>}, {pipeline_mode = #tpu.pipeline_mode<synchronous>, transform_indices = @transform_4, window_bounds = array<i64: 1, 128>}, {transform_indices = @transform_5, window_bounds = array<i64: 8, 128>}]} {
    %c0 = arith.constant 0 : index
    %c0_0 = arith.constant 0 : index
    %0 = vector.load %arg2[%c0, %c0_0] : memref<128x128xf32, #tpu.memory_space<vmem>>, vector<128x128xf32>
    %c0_1 = arith.constant 0 : index
    %c0_2 = arith.constant 0 : index
    %1 = vector.load %arg4[%c0_1, %c0_2] : memref<128x128xf32, #tpu.memory_space<vmem>>, vector<128x128xf32>
    %c0_3 = arith.constant 0 : index
    %c0_4 = arith.constant 0 : index
    %2 = vector.load %arg3[%c0_3, %c0_4] : memref<1x128xf32, #tpu.memory_space<vmem>>, vector<1x128xf32>
    %c0_5 = arith.constant 0 : index
    %c0_6 = arith.constant 0 : index
    %3 = vector.load %arg5[%c0_5, %c0_6] : memref<1x128xf32, #tpu.memory_space<vmem>>, vector<1x128xf32>
    %c0_i32 = arith.constant 0 : i32
    %c8_i32 = arith.constant 8 : i32
    %4 = arith.muli %c0_i32, %c8_i32 : i32
    %5 = tpu.assume_multiple %4, 8 : i32
    %6 = arith.index_cast %5 : i32 to index
    %c0_7 = arith.constant 0 : index
    %7 = vector.load %arg1[%6, %c0_7] : memref<8x128xf32, #tpu.memory_space<vmem>>, vector<8x128xf32>
    %cst = arith.constant dense<0.000000e+00> : vector<8x128xf32>
    %8 = tpu.matmul %7, %0, %cst {dimension_numbers = #tpu.dot_dimension_numbers<[1], [0], [0], [1], [0, 0, 1, 1], [], []>} : vector<8x128xf32>, vector<128x128xf32>, vector<8x128xf32> -> vector<8x128xf32>
    %9 = vector.broadcast %2 : vector<1x128xf32> to vector<8x128xf32>
    %10 = arith.addf %8, %9 : vector<8x128xf32>
    %11 = math.tanh %10 : vector<8x128xf32>
    %cst_8 = arith.constant dense<0.000000e+00> : vector<8x128xf32>
    %12 = tpu.matmul %11, %1, %cst_8 {dimension_numbers = #tpu.dot_dimension_numbers<[1], [0], [0], [1], [0, 0, 1, 1], [], []>} : vector<8x128xf32>, vector<128x128xf32>, vector<8x128xf32> -> vector<8x128xf32>
    %13 = vector.broadcast %3 : vector<1x128xf32> to vector<8x128xf32>
    %14 = arith.addf %12, %13 : vector<8x128xf32>
    %15 = arith.index_cast %5 : i32 to index
    %c0_9 = arith.constant 0 : index
    %16 = vector.load %arg6[%15, %c0_9] : memref<8x128xf32, #tpu.memory_space<vmem>>, vector<8x128xf32>
    tpu.vector_store %arg6[%15, %c0_9], %14 {strides = array<i32>} : memref<8x128xf32, #tpu.memory_space<vmem>>, vector<8x128xf32>,
    %c1_i32 = arith.constant 1 : i32
    return
  }
  func.func @transform_0(%arg0: i32) -> (i32, i32) {
    %c0_i32 = arith.constant 0 : i32
    %c0_i32_0 = arith.constant 0 : i32
    return %arg0, %c0_i32 : i32, i32
  }
  func.func @transform_1(%arg0: i32) -> (i32, i32) {
    %c0_i32 = arith.constant 0 : i32
    %c0_i32_0 = arith.constant 0 : i32
    %c0_i32_1 = arith.constant 0 : i32
    return %c0_i32, %c0_i32_0 : i32, i32
  }
  func.func @transform_2(%arg0: i32) -> (i32, i32) {
    %c0_i32 = arith.constant 0 : i32
    %c0_i32_0 = arith.constant 0 : i32
    %c0_i32_1 = arith.constant 0 : i32
    return %c0_i32, %c0_i32_0 : i32, i32
  }
  func.func @transform_3(%arg0: i32) -> (i32, i32) {
    %c0_i32 = arith.constant 0 : i32
    %c0_i32_0 = arith.constant 0 : i32
    %c0_i32_1 = arith.constant 0 : i32
    return %c0_i32, %c0_i32_0 : i32, i32
  }
  func.func @transform_4(%arg0: i32) -> (i32, i32) {
    %c0_i32 = arith.constant 0 : i32
    %c0_i32_0 = arith.constant 0 : i32
    %c0_i32_1 = arith.constant 0 : i32
    return %c0_i32, %c0_i32_0 : i32, i32
  }
  func.func @transform_5(%arg0: i32) -> (i32, i32) {
    %c0_i32 = arith.constant 0 : i32
    %c0_i32_0 = arith.constant 0 : i32
    return %arg0, %c0_i32 : i32, i32
  }
}

</mosaic_0001>

<llo_original>
// kernel: tpu_custom_call.1
$region0: #{tpu_custom_call.1}
  #allocation0 [shape = 'u32[]', space=smem, size = 0x4, offset = 0x4, fixed_abs, tag = 'smem constant byte address 0x4 - core index']
  #allocation1 [shape = 'u32[144,128]{1,0:T(1,128)}', space=vmem, size = 0x12000, scoped, tag = 'internal scratch']
  %s0 = inlined_call_operand.hbm [shape: f32[16,1024], index: 0, kind: input, shape index: {}]
  %s1 = inlined_call_operand.hbm [shape: f32[128,128], index: 1, kind: input, shape index: {}]
  %s2 = inlined_call_operand.vmem [shape: f32[1,128], index: 2, kind: input, shape index: {}]
  %s3 = inlined_call_operand.hbm [shape: f32[128,128], index: 3, kind: input, shape index: {}]
  %s4 = inlined_call_operand.vmem [shape: f32[1,128], index: 4, kind: input, shape index: {}]
  %s5 = inlined_call_operand.hbm [shape: f32[16,128], index: 5, kind: output, shape index: {}]
  %s6 = sld [smem:[#allocation0]]
  $region65: #{tpu_custom_call.1} parent=0
    _
  %s8 = ssub.s32 1, %s6
  %s9 = scalar_select 0, %s8, %s6
  $region1: #{tpu_custom_call.1} parent=0
    #allocation2 [shape = 'u8[8192]{0}', space=vmem, size = 0x2000, scoped, tag = 'input window, operand 0']
    #allocation3 [shape = 's32[2]{0}', space=sflag, size = 0x8, scoped, tag = 'scoped memory for tpu_custom_call.1']
    #allocation4 [shape = 's32[2]{0}', space=sflag, size = 0x8, scoped, tag = 'scoped memory for tpu_custom_call.1']
    #allocation5 [shape = 'u8[65536]{0}', space=vmem, size = 0x10000, scoped, tag = 'input window, operand 1, single buffered']
    #allocation6 [shape = 's32[1]{0}', space=sflag, size = 0x4, scoped, tag = 'scoped memory for tpu_custom_call.1']
    #allocation7 [shape = 'u8[65536]{0}', space=vmem, size = 0x10000, scoped, tag = 'input window, operand 3, single buffered']
    #allocation8 [shape = 'u8[8192]{0}', space=vmem, size = 0x2000, scoped, tag = 'output window, operand 0']
    %10 = vsyncpa [#allocation3], 0
    %s11 = scalar_lea.sflag [#allocation3], 1
    %12 = vsyncpa %s11, 0
    %13 = vsyncpa [#allocation6], 0
    %14 = vsyncpa [#allocation4], 0
    %s15 = scalar_lea.sflag [#allocation4], 1
    %16 = vsyncpa %s15, 0
    loop: start=0, step=1, limit=4
    $region2: #{tpu_custom_call.1} parent=1 // loop_pre_header
      _
    $region3: #{tpu_custom_call.1} parent=1 // loop_header
      %s18 = sphi 0, %s22
      %p19 = scmp.ge.s32.totalorder %s18, 4
      %s28 = sphi 0, %s30
      %s31 = sphi 0, %s28
      %s32 = sphi 0, %s31
      %s48 = sphi 0, %s32
      %s52 = sphi 0, %s52
      %s54 = sphi 0, %s52
      %s55 = sphi 0, %s54
      %s69 = sphi 0, %s55
      %s73 = sphi 0, %s73
      %s75 = sphi 0, %s73
      %s76 = sphi 0, %s75
      %s90 = sphi 0, %s76
      %s94 = sphi 0, %s94
      %s96 = sphi 0, %s94
      %s97 = sphi 0, %s96
      %s111 = sphi 0, %s97
      %s115 = sphi 0, %s115
      %s117 = sphi 0, %s115
      %s118 = sphi 0, %s117
      %s132 = sphi 0, %s118
      %s138 = sphi 0, %s140
      %s141 = sphi 0, %s138
      %s142 = sphi 0, %s141
      %s158 = sphi 0, %s142
    $region4: #{tpu_custom_call.1} parent=1 // loop_header_branch
      %21 = sbr.rel (%p19) target = $region8
    $region5: #{tpu_custom_call.1} parent=1 // loop_body
      %s23 = ssub.s32 %s18, 1
      %s24 = ssub.s32 %s18, 2
      %s25 = sadd.s32 %s18, 1
      %s26 = ssub.s32 %s18, %s25
      %p27 = scmp.eq.s32.totalorder %s26, 0
      %s29 = sadd.s32 %s28, 1
      %s30 = scalar_select %p27, %s28, %s29
      %p33 = pneg %p27
      %p34 = scmp.eq.s32.totalorder %s18, 1
      %p35 = por %p33, %p34
      %p36 = scmp.ne.s32.totalorder %s28, %s31
      %p37 = scmp.eq.s32.totalorder %s18, 0
      %p38 = por %p36, %p37
      %p39 = scmp.ne.s32.totalorder %s28, %s31
      %p40 = scmp.eq.s32.totalorder %s23, 1
      %p41 = por %p39, %p40
      %p42 = scmp.ne.s32.totalorder %s31, %s32
      %p43 = scmp.eq.s32.totalorder %s23, 0
      %p44 = por %p42, %p43
      %p45 = scmp.ne.s32.totalorder %s31, %s32
      %p46 = scmp.eq.s32.totalorder %s24, 1
      %p47 = por %p45, %p46
      %p49 = scmp.ne.s32.totalorder %s32, %s48
      %p50 = scmp.eq.s32.totalorder %s24, 0
      %p51 = por %p49, %p50
      %s53 = sadd.s32 %s52, 1
      %p56 = scmp.eq.s32.totalorder %s18, 1
      %p57 = scmp.ne.s32.totalorder %s52, %s54
      %p58 = scmp.eq.s32.totalorder %s18, 0
      %p59 = por %p57, %p58
      %p60 = scmp.ne.s32.totalorder %s52, %s54
      %p61 = scmp.eq.s32.totalorder %s23, 1
      %p62 = por %p60, %p61
      %p63 = scmp.ne.s32.totalorder %s54, %s55
      %p64 = scmp.eq.s32.totalorder %s23, 0
      %p65 = por %p63, %p64
      %p66 = scmp.ne.s32.totalorder %s54, %s55
      %p67 = scmp.eq.s32.totalorder %s24, 1
      %p68 = por %p66, %p67
      %p70 = scmp.ne.s32.totalorder %s55, %s69
      %p71 = scmp.eq.s32.totalorder %s24, 0
      %p72 = por %p70, %p71
      %s74 = sadd.s32 %s73, 1
      %p77 = scmp.eq.s32.totalorder %s18, 1
      %p78 = scmp.ne.s32.totalorder %s73, %s75
      %p79 = scmp.eq.s32.totalorder %s18, 0
      %p80 = por %p78, %p79
      %p81 = scmp.ne.s32.totalorder %s73, %s75
      %p82 = scmp.eq.s32.totalorder %s23, 1
      %p83 = por %p81, %p82
      %p84 = scmp.ne.s32.totalorder %s75, %s76
      %p85 = scmp.eq.s32.totalorder %s23, 0
      %p86 = por %p84, %p85
      %p87 = scmp.ne.s32.totalorder %s75, %s76
      %p88 = scmp.eq.s32.totalorder %s24, 1
      %p89 = por %p87, %p88
      %p91 = scmp.ne.s32.totalorder %s76, %s90
      %p92 = scmp.eq.s32.totalorder %s24, 0
      %p93 = por %p91, %p92
      %s95 = sadd.s32 %s94, 1
      %p98 = scmp.eq.s32.totalorder %s18, 1
      %p99 = scmp.ne.s32.totalorder %s94, %s96
      %p100 = scmp.eq.s32.totalorder %s18, 0
      %p101 = por %p99, %p100
      %p102 = scmp.ne.s32.totalorder %s94, %s96
      %p103 = scmp.eq.s32.totalorder %s23, 1
      %p104 = por %p102, %p103
      %p105 = scmp.ne.s32.totalorder %s96, %s97
      %p106 = scmp.eq.s32.totalorder %s23, 0
      %p107 = por %p105, %p106
      %p108 = scmp.ne.s32.totalorder %s96, %s97
      %p109 = scmp.eq.s32.totalorder %s24, 1
      %p110 = por %p108, %p109
      %p112 = scmp.ne.s32.totalorder %s97, %s111
      %p113 = scmp.eq.s32.totalorder %s24, 0
      %p114 = por %p112, %p113
      %s116 = sadd.s32 %s115, 1
      %p119 = scmp.eq.s32.totalorder %s18, 1
      %p120 = scmp.ne.s32.totalorder %s115, %s117
      %p121 = scmp.eq.s32.totalorder %s18, 0
      %p122 = por %p120, %p121
      %p123 = scmp.ne.s32.totalorder %s115, %s117
      %p124 = scmp.eq.s32.totalorder %s23, 1
      %p125 = por %p123, %p124
      %p126 = scmp.ne.s32.totalorder %s117, %s118
      %p127 = scmp.eq.s32.totalorder %s23, 0
      %p128 = por %p126, %p127
      %p129 = scmp.ne.s32.totalorder %s117, %s118
      %p130 = scmp.eq.s32.totalorder %s24, 1
      %p131 = por %p129, %p130
      %p133 = scmp.ne.s32.totalorder %s118, %s132
      %p134 = scmp.eq.s32.totalorder %s24, 0
      %p135 = por %p133, %p134
      %s136 = ssub.s32 %s18, %s25
      %p137 = scmp.eq.s32.totalorder %s136, 0
      %s139 = sadd.s32 %s138, 1
      %s140 = scalar_select %p137, %s138, %s139
      %p143 = pneg %p137
      %p144 = scmp.eq.s32.totalorder %s18, 1
      %p145 = por %p143, %p144
      %p146 = scmp.ne.s32.totalorder %s138, %s141
      %p147 = scmp.eq.s32.totalorder %s18, 0
      %p148 = por %p146, %p147
      %p149 = scmp.ne.s32.totalorder %s138, %s141
      %p150 = scmp.eq.s32.totalorder %s23, 1
      %p151 = por %p149, %p150
      %p152 = scmp.ne.s32.totalorder %s141, %s142
      %p153 = scmp.eq.s32.totalorder %s23, 0
      %p154 = por %p152, %p153
      %p155 = scmp.ne.s32.totalorder %s141, %s142
      %p156 = scmp.eq.s32.totalorder %s24, 1
      %p157 = por %p155, %p156
      %p159 = scmp.ne.s32.totalorder %s142, %s158
      %p160 = scmp.eq.s32.totalorder %s24, 0
      %p161 = por %p159, %p160
      %p162 = scmp.le.s32.totalorder 1, %s18
      %p163 = scmp.lt.s32.totalorder %s18, 3
      %p164 = pnand %p162, %p163
      %p165 = pneg %p164
      // Predicated region
      $region9: #{tpu_custom_call.1} parent=5 // pred_check
        _
      $region10: #{tpu_custom_call.1} parent=5 // pred_check_branch
        %167 = sbr.rel (%p164) target = $region12
      $region11: #{tpu_custom_call.1} parent=5 // pred_region
        %s168 = ssub.s32 %s18, 1
        // Predicated region
        $region13: #{tpu_custom_call.1} parent=11 // pred_check
          %p169 = pneg %p65
        $region14: #{tpu_custom_call.1} parent=11 // pred_check_branch
          %171 = sbr.rel (%p169) target = $region16
        $region15: #{tpu_custom_call.1} parent=11 // pred_region
          %s173 = ssub.s32 2048, 2048
          %174 = vsyncadd [#allocation6], %s173
          %s175 = sshll.u32 [#allocation5], 4
          %s176 = int_to_ptr.vmem [resolvable:$true] %s175
          %181 = dma.hbm_to_vmem [thread:$0]  %s1, 2048, %s176, [#allocation6], 128, 128, 8
        $region16: #{tpu_custom_call.1} parent=11 // pred_fallthru
          _
        // Predicated region
        $region17: #{tpu_custom_call.1} parent=11 // pred_check
          %p182 = pneg %p86
        $region18: #{tpu_custom_call.1} parent=11 // pred_check_branch
          %184 = sbr.rel (%p182) target = $region20
        $region19: #{tpu_custom_call.1} parent=11 // pred_region
          _
        $region20: #{tpu_custom_call.1} parent=11 // pred_fallthru
          _
        // Predicated region
        $region21: #{tpu_custom_call.1} parent=11 // pred_check
          %p185 = pneg %p107
        $region22: #{tpu_custom_call.1} parent=11 // pred_check_branch
          %187 = sbr.rel (%p185) target = $region24
        $region23: #{tpu_custom_call.1} parent=11 // pred_region
          %s189 = ssub.s32 2048, 2048
          %190 = vsyncadd [#allocation6], %s189
          %s191 = sshll.u32 [#allocation7], 4
          %s192 = int_to_ptr.vmem [resolvable:$true] %s191
          %197 = dma.hbm_to_vmem [thread:$0]  %s3, 2048, %s192, [#allocation6], 128, 128, 8
        $region24: #{tpu_custom_call.1} parent=11 // pred_fallthru
          _
        // Predicated region
        $region25: #{tpu_custom_call.1} parent=11 // pred_check
          %p198 = pneg %p128
        $region26: #{tpu_custom_call.1} parent=11 // pred_check_branch
          %200 = sbr.rel (%p198) target = $region28
        $region27: #{tpu_custom_call.1} parent=11 // pred_region
          _
        $region28: #{tpu_custom_call.1} parent=11 // pred_fallthru
          _
      $region12: #{tpu_custom_call.1} parent=5 // pred_fallthru
        _
      %p201 = scmp.lt.s32.totalorder %s18, 2
      // Predicated region
      $region29: #{tpu_custom_call.1} parent=5 // pred_check
        %p202 = pneg %p201
      $region30: #{tpu_custom_call.1} parent=5 // pred_check_branch
        %204 = sbr.rel (%p202) target = $region32
      $region31: #{tpu_custom_call.1} parent=5 // pred_region
        // Predicated region
        $region33: #{tpu_custom_call.1} parent=31 // pred_check
          %p205 = pneg %p38
        $region34: #{tpu_custom_call.1} parent=31 // pred_check_branch
          %207 = sbr.rel (%p205) target = $region36
        $region35: #{tpu_custom_call.1} parent=31 // pred_region
          %s208 = sand.u32 %s28, 1
          %s209 = scalar_lea.sflag [#allocation3], %s208
          %s210 = sand.u32 %s28, 1
          %s211 = smul.addr %s210, 8
          %s212 = scalar_lea.vmem [#allocation2], %s211
          %s214 = ssub.s32 128, 128
          %215 = vsyncadd %s209, %s214
          %s216 = smul.addr %s18, 8
          %s217 = smul.addr %s216, 128
          %s218 = scalar_lea.hbm %s0, %s217
          %s220 = sshll.u32 %s212, 4
          %s221 = int_to_ptr.vmem [resolvable:$true] %s220
          %223 = dma.hbm_to_vmem [thread:$0]  %s218, 128, %s221, %s209
        $region36: #{tpu_custom_call.1} parent=31 // pred_fallthru
          _
      $region32: #{tpu_custom_call.1} parent=5 // pred_fallthru
        _
      %p224 = scmp.le.s32.totalorder 1, %s18
      %p225 = scmp.lt.s32.totalorder %s18, 3
      %p226 = pnand %p224, %p225
      %p227 = pneg %p226
      // Predicated region
      $region37: #{tpu_custom_call.1} parent=5 // pred_check
        _
      $region38: #{tpu_custom_call.1} parent=5 // pred_check_branch
        %229 = sbr.rel (%p226) target = $region40
      $region39: #{tpu_custom_call.1} parent=5 // pred_region
        %s230 = ssub.s32 %s18, 1
        %s231 = sand.u32 %s31, 1
        %s232 = scalar_lea.sflag [#allocation3], %s231
        %s233 = sand.u32 %s31, 1
        %s234 = smul.addr %s233, 8
        %s235 = scalar_lea.vmem [#allocation2], %s234
        // Predicated region
        $region41: #{tpu_custom_call.1} parent=39 // pred_check
          %p236 = pneg %p44
        $region42: #{tpu_custom_call.1} parent=39 // pred_check_branch
          %238 = sbr.rel (%p236) target = $region44
        $region43: #{tpu_custom_call.1} parent=39 // pred_region
          %239 = dma.done %s232, 128
        $region44: #{tpu_custom_call.1} parent=39 // pred_fallthru
          _
        // Predicated region
        $region45: #{tpu_custom_call.1} parent=39 // pred_check
          %p240 = pneg %p65
        $region46: #{tpu_custom_call.1} parent=39 // pred_check_branch
          %242 = sbr.rel (%p240) target = $region48
        $region47: #{tpu_custom_call.1} parent=39 // pred_region
          %243 = dma.done [#allocation6], 2048
        $region48: #{tpu_custom_call.1} parent=39 // pred_fallthru
          _
        // Predicated region
        $region49: #{tpu_custom_call.1} parent=39 // pred_check
          %p244 = pneg %p107
        $region50: #{tpu_custom_call.1} parent=39 // pred_check_branch
          %246 = sbr.rel (%p244) target = $region52
        $region51: #{tpu_custom_call.1} parent=39 // pred_region
          %247 = dma.done [#allocation6], 2048
        $region52: #{tpu_custom_call.1} parent=39 // pred_fallthru
          _
        %s248 = sand.u32 %s31, 1
        %s249 = scalar_lea.sflag [#allocation3], %s248
        %s250 = sand.u32 %s31, 1
        %s251 = smul.addr %s250, 8
        %s252 = scalar_lea.vmem [#allocation2], %s251
        %p253 = pneg %p44
        %p254 = pneg %p41
        %p255 = pneg %p65
        %p256 = pneg %p62
        %p257 = pneg %p86
        %p258 = pneg %p83
        %p259 = pneg %p107
        %p260 = pneg %p104
        %p261 = pneg %p128
        %p262 = pneg %p125
        %p263 = pneg %p154
        %p264 = pneg %p151
        %s265 = sand.u32 %s141, 1
        %s266 = scalar_lea.sflag [#allocation4], %s265
        %s267 = sand.u32 %s141, 1
        %s268 = smul.addr %s267, 8
        %s269 = scalar_lea.vmem [#allocation8], %s268
        %v270 = vld [vmem:[#allocation5] sm:$0xff]
        %v271 = vld [vmem:[#allocation5 + $0x8] sm:$0xff]
        %v272 = vld [vmem:[#allocation5 + $0x10] sm:$0xff]
        %v273 = vld [vmem:[#allocation5 + $0x18] sm:$0xff]
        %v274 = vld [vmem:[#allocation5 + $0x20] sm:$0xff]
        %v275 = vld [vmem:[#allocation5 + $0x28] sm:$0xff]
        %v276 = vld [vmem:[#allocation5 + $0x30] sm:$0xff]
        %v277 = vld [vmem:[#allocation5 + $0x38] sm:$0xff]
        %v278 = vld [vmem:[#allocation5 + $0x40] sm:$0xff]
        %v279 = vld [vmem:[#allocation5 + $0x48] sm:$0xff]
        %v280 = vld [vmem:[#allocation5 + $0x50] sm:$0xff]
        %v281 = vld [vmem:[#allocation5 + $0x58] sm:$0xff]
        %v282 = vld [vmem:[#allocation5 + $0x60] sm:$0xff]
        %v283 = vld [vmem:[#allocation5 + $0x68] sm:$0xff]
        %v284 = vld [vmem:[#allocation5 + $0x70] sm:$0xff]
        %v285 = vld [vmem:[#allocation5 + $0x78] sm:$0xff]
        %v286 = vld [vmem:[#allocation7] sm:$0xff]
        %v287 = vld [vmem:[#allocation7 + $0x8] sm:$0xff]
        %v288 = vld [vmem:[#allocation7 + $0x10] sm:$0xff]
        %v289 = vld [vmem:[#allocation7 + $0x18] sm:$0xff]
        %v290 = vld [vmem:[#allocation7 + $0x20] sm:$0xff]
        %v291 = vld [vmem:[#allocation7 + $0x28] sm:$0xff]
        %v292 = vld [vmem:[#allocation7 + $0x30] sm:$0xff]
        %v293 = vld [vmem:[#allocation7 + $0x38] sm:$0xff]
        %v294 = vld [vmem:[#allocation7 + $0x40] sm:$0xff]
        %v295 = vld [vmem:[#allocation7 + $0x48] sm:$0xff]
        %v296 = vld [vmem:[#allocation7 + $0x50] sm:$0xff]
        %v297 = vld [vmem:[#allocation7 + $0x58] sm:$0xff]
        %v298 = vld [vmem:[#allocation7 + $0x60] sm:$0xff]
        %v299 = vld [vmem:[#allocation7 + $0x68] sm:$0xff]
        %v300 = vld [vmem:[#allocation7 + $0x70] sm:$0xff]
        %v301 = vld [vmem:[#allocation7 + $0x78] sm:$0xff]
        %v302 = vld [vmem:[%s2] sm:$0x1]
        %v303 = vld [vmem:[%s4] sm:$0x1]
        %v304 = vld [vmem:[%s235] sm:$0xff]
        %v306 = vlaneseq
        %v307 = vshrl.u32 %v306, 7
        %v308 = vsub.s32 0, %v307
        %v309 = vrot.slane %v302, %v308
        %311 = vmatprep.subr.mxu0 0.0
        %312 = vmatpush1.msra.mxu0 %v270
        %313 = vmatprep.subr.mxu0 0.0
        %314 = vmatpush1.msra.mxu0 %v271
        %315 = vmatprep.subr.mxu0 0.0
        %316 = vmatpush1.msra.mxu0 %v272
        %317 = vmatprep.subr.mxu0 0.0
        %318 = vmatpush1.msra.mxu0 %v273
        %319 = vmatprep.subr.mxu0 0.0
        %320 = vmatpush1.msra.mxu0 %v274
        %321 = vmatprep.subr.mxu0 0.0
        %322 = vmatpush1.msra.mxu0 %v275
        %323 = vmatprep.subr.mxu0 0.0
        %324 = vmatpush1.msra.mxu0 %v276
        %325 = vmatprep.subr.mxu0 0.0
        %326 = vmatpush1.msra.mxu0 %v277
        %327 = vmatprep.subr.mxu0 0.0
        %328 = vmatpush1.msra.mxu0 %v278
        %329 = vmatprep.subr.mxu0 0.0
        %330 = vmatpush1.msra.mxu0 %v279
        %331 = vmatprep.subr.mxu0 0.0
        %332 = vmatpush1.msra.mxu0 %v280
        %333 = vmatprep.subr.mxu0 0.0
        %334 = vmatpush1.msra.mxu0 %v281
        %335 = vmatprep.subr.mxu0 0.0
        %336 = vmatpush1.msra.mxu0 %v282
        %337 = vmatprep.subr.mxu0 0.0
        %338 = vmatpush1.msra.mxu0 %v283
        %339 = vmatprep.subr.mxu0 0.0
        %340 = vmatpush1.msra.mxu0 %v284
        %341 = vmatprep.subr.mxu0 0.0
        %342 = vmatpush1.msra.mxu0 %v285
        %343 = vmatprep.subr.mxu0 0.0
        %344 = vmatpush1.msra.mxu0 0.0
        %345 = vmatprep.subr.mxu0 0.0
        %346 = vmatpush1.msra.mxu0 0.0
        %347 = vmatprep.subr.mxu0 0.0
        %348 = vmatpush1.msra.mxu0 0.0
        %349 = vmatprep.subr.mxu0 0.0
        %350 = vmatpush1.msra.mxu0 0.0
        %351 = vmatprep.subr.mxu0 0.0
        %352 = vmatpush1.msra.mxu0 0.0
        %353 = vmatprep.subr.mxu0 0.0
        %354 = vmatpush1.msra.mxu0 0.0
        %355 = vmatprep.subr.mxu0 0.0
        %356 = vmatpush1.msra.mxu0 0.0
        %357 = vmatprep.subr.mxu0 0.0
        %358 = vmatpush1.msra.mxu0 0.0
        %359 = vmatprep.subr.mxu0 0.0
        %360 = vmatpush1.msra.mxu0 0.0
        %361 = vmatprep.subr.mxu0 0.0
        %362 = vmatpush1.msra.mxu0 0.0
        %363 = vmatprep.subr.mxu0 0.0
        %364 = vmatpush1.msra.mxu0 0.0
        %365 = vmatprep.subr.mxu0 0.0
        %366 = vmatpush1.msra.mxu0 0.0
        %367 = vmatprep.subr.mxu0 0.0
        %368 = vmatpush1.msra.mxu0 0.0
        %369 = vmatprep.subr.mxu0 0.0
        %370 = vmatpush1.msra.mxu0 0.0
        %371 = vmatprep.subr.mxu0 0.0
        %372 = vmatpush1.msra.mxu0 0.0
        %373 = vmatprep.subr.mxu0 0.0
        %374 = vmatpush1.msra.mxu0 0.0
        %375 = vmatprep.mubr.f32.mxu0 0.0
        %376 = vmatmul.mubr.f32.gmra.mrb[0].mxu0 %v304
        %v377 = vpop.f32.mrb[0].mxu0
        %v378 = vadd.f32 %v309, %v377
        %v379 = vpop.f32.mrb[0].mxu0
        %380 = vdwg.mxu0
        %v381 = vtanh.pop %v378
        %v383 = vlaneseq
        %v384 = vshrl.u32 %v383, 7
        %v385 = vsub.s32 0, %v384
        %v386 = vrot.slane %v303, %v385
        %388 = vmatprep.subr.mxu0 0.0
        %389 = vmatpush1.msra.mxu0 %v286
        %390 = vmatprep.subr.mxu0 0.0
        %391 = vmatpush1.msra.mxu0 %v287
        %392 = vmatprep.subr.mxu0 0.0
        %393 = vmatpush1.msra.mxu0 %v288
        %394 = vmatprep.subr.mxu0 0.0
        %395 = vmatpush1.msra.mxu0 %v289
        %396 = vmatprep.subr.mxu0 0.0
        %397 = vmatpush1.msra.mxu0 %v290
        %398 = vmatprep.subr.mxu0 0.0
        %399 = vmatpush1.msra.mxu0 %v291
        %400 = vmatprep.subr.mxu0 0.0
        %401 = vmatpush1.msra.mxu0 %v292
        %402 = vmatprep.subr.mxu0 0.0
        %403 = vmatpush1.msra.mxu0 %v293
        %404 = vmatprep.subr.mxu0 0.0
        %405 = vmatpush1.msra.mxu0 %v294
        %406 = vmatprep.subr.mxu0 0.0
        %407 = vmatpush1.msra.mxu0 %v295
        %408 = vmatprep.subr.mxu0 0.0
        %409 = vmatpush1.msra.mxu0 %v296
        %410 = vmatprep.subr.mxu0 0.0
        %411 = vmatpush1.msra.mxu0 %v297
        %412 = vmatprep.subr.mxu0 0.0
        %413 = vmatpush1.msra.mxu0 %v298
        %414 = vmatprep.subr.mxu0 0.0
        %415 = vmatpush1.msra.mxu0 %v299
        %416 = vmatprep.subr.mxu0 0.0
        %417 = vmatpush1.msra.mxu0 %v300
        %418 = vmatprep.subr.mxu0 0.0
        %419 = vmatpush1.msra.mxu0 %v301
        %420 = vmatprep.subr.mxu0 0.0
        %421 = vmatpush1.msra.mxu0 0.0
        %422 = vmatprep.subr.mxu0 0.0
        %423 = vmatpush1.msra.mxu0 0.0
        %424 = vmatprep.subr.mxu0 0.0
        %425 = vmatpush1.msra.mxu0 0.0
        %426 = vmatprep.subr.mxu0 0.0
        %427 = vmatpush1.msra.mxu0 0.0
        %428 = vmatprep.subr.mxu0 0.0
        %429 = vmatpush1.msra.mxu0 0.0
        %430 = vmatprep.subr.mxu0 0.0
        %431 = vmatpush1.msra.mxu0 0.0
        %432 = vmatprep.subr.mxu0 0.0
        %433 = vmatpush1.msra.mxu0 0.0
        %434 = vmatprep.subr.mxu0 0.0
        %435 = vmatpush1.msra.mxu0 0.0
        %436 = vmatprep.subr.mxu0 0.0
        %437 = vmatpush1.msra.mxu0 0.0
        %438 = vmatprep.subr.mxu0 0.0
        %439 = vmatpush1.msra.mxu0 0.0
        %440 = vmatprep.subr.mxu0 0.0
        %441 = vmatpush1.msra.mxu0 0.0
        %442 = vmatprep.subr.mxu0 0.0
        %443 = vmatpush1.msra.mxu0 0.0
        %444 = vmatprep.subr.mxu0 0.0
        %445 = vmatpush1.msra.mxu0 0.0
        %446 = vmatprep.subr.mxu0 0.0
        %447 = vmatpush1.msra.mxu0 0.0
        %448 = vmatprep.subr.mxu0 0.0
        %449 = vmatpush1.msra.mxu0 0.0
        %450 = vmatprep.subr.mxu0 0.0
        %451 = vmatpush1.msra.mxu0 0.0
        %452 = vmatprep.mubr.f32.mxu0 0.0
        %453 = vmatmul.mubr.f32.gmra.mrb[0].mxu0 %v381
        %v454 = vpop.f32.mrb[0].mxu0
        %v455 = vadd.f32 %v386, %v454
        %v456 = vpop.f32.mrb[0].mxu0
        %457 = vdwg.mxu0
        %458 = vst [vmem:[%s269] sm:$0xff] %v455
        %s459 = sand.u32 %s141, 1
        %s460 = scalar_lea.sflag [#allocation4], %s459
        %s461 = sand.u32 %s141, 1
        %s462 = smul.addr %s461, 8
        %s463 = scalar_lea.vmem [#allocation8], %s462
        // Predicated region
        $region53: #{tpu_custom_call.1} parent=39 // pred_check
          %p464 = pneg %p151
        $region54: #{tpu_custom_call.1} parent=39 // pred_check_branch
          %466 = sbr.rel (%p464) target = $region56
        $region55: #{tpu_custom_call.1} parent=39 // pred_region
          %s468 = ssub.s32 128, 128
          %469 = vsyncadd %s460, %s468
          %s470 = smul.addr %s23, 128
          %s471 = scalar_lea.hbm %s5, %s470
          %s473 = sshll.u32 %s463, 4
          %s474 = int_to_ptr.vmem [resolvable:$true] %s473
          %476 = dma.vmem_to_hbm [thread:$0]  %s474, 128, %s471, %s460
        $region56: #{tpu_custom_call.1} parent=39 // pred_fallthru
          _
      $region40: #{tpu_custom_call.1} parent=5 // pred_fallthru
        _
      %p477 = scmp.le.s32.totalorder 2, %s18
      // Predicated region
      $region57: #{tpu_custom_call.1} parent=5 // pred_check
        %p478 = pneg %p477
      $region58: #{tpu_custom_call.1} parent=5 // pred_check_branch
        %480 = sbr.rel (%p478) target = $region60
      $region59: #{tpu_custom_call.1} parent=5 // pred_region
        %s481 = ssub.s32 %s18, 2
        // Predicated region
        $region61: #{tpu_custom_call.1} parent=59 // pred_check
          %p482 = pneg %p157
        $region62: #{tpu_custom_call.1} parent=59 // pred_check_branch
          %484 = sbr.rel (%p482) target = $region64
        $region63: #{tpu_custom_call.1} parent=59 // pred_region
          %s485 = sand.u32 %s142, 1
          %s486 = scalar_lea.sflag [#allocation4], %s485
          %s487 = sand.u32 %s142, 1
          %s488 = smul.addr %s487, 8
          %s489 = scalar_lea.vmem [#allocation8], %s488
          %490 = dma.done %s486, 128
        $region64: #{tpu_custom_call.1} parent=59 // pred_fallthru
          _
      $region60: #{tpu_custom_call.1} parent=5 // pred_fallthru
        _
    $region6: #{tpu_custom_call.1} parent=1 // loop_footer
      %s22 = sadd.s32 1, %s18
    $region7: #{tpu_custom_call.1} parent=1 // loop_footer_branch
      %17 = sbr.rel target = $region3
    $region8: #{tpu_custom_call.1} parent=1 // loop_exit
      _
    %491 = vsyncpa [#allocation3], 1
    %s492 = scalar_lea.sflag [#allocation3], 1
    %493 = vsyncpa %s492, 1
    %494 = vsyncpa [#allocation6], 1
    %495 = vsyncpa [#allocation4], 1
    %s496 = scalar_lea.sflag [#allocation4], 1
    %497 = vsyncpa %s496, 1

// kernel: tpu_custom_call.1
$region0: #{tpu_custom_call.1}
  #allocation0 [shape = 'u32[]', space=smem, size = 0x4, offset = 0x4, fixed_abs, tag = 'smem constant byte address 0x4 - core index']
  #allocation1 [shape = 'u32[144,128]{1,0:T(1,128)}', space=vmem, size = 0x12000, scoped, tag = 'internal scratch']
  %s0 = inlined_call_operand.hbm [shape: f32[16,1024], index: 0, kind: input, shape index: {}]
  %s1 = inlined_call_operand.hbm [shape: f32[128,128], index: 1, kind: input, shape index: {}]
  %s2 = inlined_call_operand.vmem [shape: f32[1,128], index: 2, kind: input, shape index: {}]
  %s3 = inlined_call_operand.hbm [shape: f32[128,128], index: 3, kind: input, shape index: {}]
  %s4 = inlined_call_operand.vmem [shape: f32[1,128], index: 4, kind: input, shape index: {}]
  %s5 = inlined_call_operand.hbm [shape: f32[16,128], index: 5, kind: output, shape index: {}]
  %s6 = sld [smem:[#allocation0]]
  $region65: #{tpu_custom_call.1} parent=0
    _
  %s8 = ssub.s32 1, %s6
  %s9 = scalar_select 0, %s8, %s6
  $region1: #{tpu_custom_call.1} parent=0
    #allocation2 [shape = 'u8[8192]{0}', space=vmem, size = 0x2000, scoped, tag = 'input window, operand 0']
    #allocation3 [shape = 's32[2]{0}', space=sflag, size = 0x8, scoped, tag = 'scoped memory for tpu_custom_call.1']
    #allocation4 [shape = 's32[2]{0}', space=sflag, size = 0x8, scoped, tag = 'scoped memory for tpu_custom_call.1']
    #allocation5 [shape = 'u8[65536]{0}', space=vmem, size = 0x10000, scoped, tag = 'input window, operand 1, single buffered']
    #allocation6 [shape = 's32[1]{0}', space=sflag, size = 0x4, scoped, tag = 'scoped memory for tpu_custom_call.1']
    #allocation7 [shape = 'u8[65536]{0}', space=vmem, size = 0x10000, scoped, tag = 'input window, operand 3, single buffered']
    #allocation8 [shape = 'u8[8192]{0}', space=vmem, size = 0x2000, scoped, tag = 'output window, operand 0']
    %10 = vsyncpa [#allocation3], 0
    %s11 = scalar_lea.sflag [#allocation3], 1
    %12 = vsyncpa %s11, 0
    %13 = vsyncpa [#allocation6], 0
    %14 = vsyncpa [#allocation4], 0
    %s15 = scalar_lea.sflag [#allocation4], 1
    %16 = vsyncpa %s15, 0
    loop: start=0, step=1, limit=4
    $region2: #{tpu_custom_call.1} parent=1 // loop_pre_header
      _
    $region3: #{tpu_custom_call.1} parent=1 // loop_header
      %s18 = sphi 0, %s22
      %p19 = scmp.ge.s32.totalorder %s18, 4
      %s28 = sphi 0, %s30
      %s31 = sphi 0, %s28
      %s32 = sphi 0, %s31
      %s48 = sphi 0, %s32
      %s52 = sphi 0, %s52
      %s54 = sphi 0, %s52
      %s55 = sphi 0, %s54
      %s69 = sphi 0, %s55
      %s73 = sphi 0, %s73
      %s75 = sphi 0, %s73
      %s76 = sphi 0, %s75
      %s90 = sphi 0, %s76
      %s94 = sphi 0, %s94
      %s96 = sphi 0, %s94
      %s97 = sphi 0, %s96
      %s111 = sphi 0, %s97
      %s115 = sphi 0, %s115
      %s117 = sphi 0, %s115
      %s118 = sphi 0, %s117
      %s132 = sphi 0, %s118
      %s138 = sphi 0, %s140
      %s141 = sphi 0, %s138
      %s142 = sphi 0, %s141
      %s158 = sphi 0, %s142
    $region4: #{tpu_custom_call.1} parent=1 // loop_header_branch
      %21 = sbr.rel (%p19) target = $region8
    $region5: #{tpu_custom_call.1} parent=1 // loop_body
      %s23 = ssub.s32 %s18, 1
      %s24 = ssub.s32 %s18, 2
      %s25 = sadd.s32 %s18, 1
      %s26 = ssub.s32 %s18, %s25
      %p27 = scmp.eq.s32.totalorder %s26, 0
      %s29 = sadd.s32 %s28, 1
      %s30 = scalar_select %p27, %s28, %s29
      %p33 = pneg %p27
      %p34 = scmp.eq.s32.totalorder %s18, 1
      %p35 = por %p33, %p34
      %p36 = scmp.ne.s32.totalorder %s28, %s31
      %p37 = scmp.eq.s32.totalorder %s18, 0
      %p38 = por %p36, %p37
      %p39 = scmp.ne.s32.totalorder %s28, %s31
      %p40 = scmp.eq.s32.totalorder %s23, 1
      %p41 = por %p39, %p40
      %p42 = scmp.ne.s32.totalorder %s31, %s32
      %p43 = scmp.eq.s32.totalorder %s23, 0
      %p44 = por %p42, %p43
      %p45 = scmp.ne.s32.totalorder %s31, %s32
      %p46 = scmp.eq.s32.totalorder %s24, 1
      %p47 = por %p45, %p46
      %p49 = scmp.ne.s32.totalorder %s32, %s48
      %p50 = scmp.eq.s32.totalorder %s24, 0
      %p51 = por %p49, %p50
      %s53 = sadd.s32 %s52, 1
      %p56 = scmp.eq.s32.totalorder %s18, 1
      %p57 = scmp.ne.s32.totalorder %s52, %s54
      %p58 = scmp.eq.s32.totalorder %s18, 0
      %p59 = por %p57, %p58
      %p60 = scmp.ne.s32.totalorder %s52, %s54
      %p61 = scmp.eq.s32.totalorder %s23, 1
      %p62 = por %p60, %p61
      %p63 = scmp.ne.s32.totalorder %s54, %s55
      %p64 = scmp.eq.s32.totalorder %s23, 0
      %p65 = por %p63, %p64
      %p66 = scmp.ne.s32.totalorder %s54, %s55
      %p67 = scmp.eq.s32.totalorder %s24, 1
      %p68 = por %p66, %p67
      %p70 = scmp.ne.s32.totalorder %s55, %s69
      %p71 = scmp.eq.s32.totalorder %s24, 0
      %p72 = por %p70, %p71
      %s74 = sadd.s32 %s73, 1
      %p77 = scmp.eq.s32.totalorder %s18, 1
      %p78 = scmp.ne.s32.totalorder %s73, %s75
      %p79 = scmp.eq.s32.totalorder %s18, 0
      %p80 = por %p78, %p79
      %p81 = scmp.ne.s32.totalorder %s73, %s75
      %p82 = scmp.eq.s32.totalorder %s23, 1
      %p83 = por %p81, %p82
      %p84 = scmp.ne.s32.totalorder %s75, %s76
      %p85 = scmp.eq.s32.totalorder %s23, 0
      %p86 = por %p84, %p85
      %p87 = scmp.ne.s32.totalorder %s75, %s76
      %p88 = scmp.eq.s32.totalorder %s24, 1
      %p89 = por %p87, %p88
      %p91 = scmp.ne.s32.totalorder %s76, %s90
      %p92 = scmp.eq.s32.totalorder %s24, 0
      %p93 = por %p91, %p92
      %s95 = sadd.s32 %s94, 1
      %p98 = scmp.eq.s32.totalorder %s18, 1
      %p99 = scmp.ne.s32.totalorder %s94, %s96
      %p100 = scmp.eq.s32.totalorder %s18, 0
      %p101 = por %p99, %p100
      %p102 = scmp.ne.s32.totalorder %s94, %s96
      %p103 = scmp.eq.s32.totalorder %s23, 1
      %p104 = por %p102, %p103
      %p105 = scmp.ne.s32.totalorder %s96, %s97
      %p106 = scmp.eq.s32.totalorder %s23, 0
      %p107 = por %p105, %p106
      %p108 = scmp.ne.s32.totalorder %s96, %s97
      %p109 = scmp.eq.s32.totalorder %s24, 1
      %p110 = por %p108, %p109
      %p112 = scmp.ne.s32.totalorder %s97, %s111
      %p113 = scmp.eq.s32.totalorder %s24, 0
      %p114 = por %p112, %p113
      %s116 = sadd.s32 %s115, 1
      %p119 = scmp.eq.s32.totalorder %s18, 1
      %p120 = scmp.ne.s32.totalorder %s115, %s117
      %p121 = scmp.eq.s32.totalorder %s18, 0
      %p122 = por %p120, %p121
      %p123 = scmp.ne.s32.totalorder %s115, %s117
      %p124 = scmp.eq.s32.totalorder %s23, 1
      %p125 = por %p123, %p124
      %p126 = scmp.ne.s32.totalorder %s117, %s118
      %p127 = scmp.eq.s32.totalorder %s23, 0
      %p128 = por %p126, %p127
      %p129 = scmp.ne.s32.totalorder %s117, %s118
      %p130 = scmp.eq.s32.totalorder %s24, 1
      %p131 = por %p129, %p130
      %p133 = scmp.ne.s32.totalorder %s118, %s132
      %p134 = scmp.eq.s32.totalorder %s24, 0
      %p135 = por %p133, %p134
      %s136 = ssub.s32 %s18, %s25
      %p137 = scmp.eq.s32.totalorder %s136, 0
      %s139 = sadd.s32 %s138, 1
      %s140 = scalar_select %p137, %s138, %s139
      %p143 = pneg %p137
      %p144 = scmp.eq.s32.totalorder %s18, 1
      %p145 = por %p143, %p144
      %p146 = scmp.ne.s32.totalorder %s138, %s141
      %p147 = scmp.eq.s32.totalorder %s18, 0
      %p148 = por %p146, %p147
      %p149 = scmp.ne.s32.totalorder %s138, %s141
      %p150 = scmp.eq.s32.totalorder %s23, 1
      %p151 = por %p149, %p150
      %p152 = scmp.ne.s32.totalorder %s141, %s142
      %p153 = scmp.eq.s32.totalorder %s23, 0
      %p154 = por %p152, %p153
      %p155 = scmp.ne.s32.totalorder %s141, %s142
      %p156 = scmp.eq.s32.totalorder %s24, 1
      %p157 = por %p155, %p156
      %p159 = scmp.ne.s32.totalorder %s142, %s158
      %p160 = scmp.eq.s32.totalorder %s24, 0
      %p161 = por %p159, %p160
      %p162 = scmp.le.s32.totalorder 1, %s18
      %p163 = scmp.lt.s32.totalorder %s18, 3
      %p164 = pnand %p162, %p163
      %p165 = pneg %p164
      // Predicated region
      $region9: #{tpu_custom_call.1} parent=5 // pred_check
        _
      $region10: #{tpu_custom_call.1} parent=5 // pred_check_branch
        %167 = sbr.rel (%p164) target = $region12
      $region11: #{tpu_custom_call.1} parent=5 // pred_region
        %s168 = ssub.s32 %s18, 1
        // Predicated region
        $region13: #{tpu_custom_call.1} parent=11 // pred_check
          %p169 = pneg %p65
        $region14: #{tpu_custom_call.1} parent=11 // pred_check_branch
          %171 = sbr.rel (%p169) target = $region16
        $region15: #{tpu_custom_call.1} parent=11 // pred_region
          %s173 = ssub.s32 2048, 2048
          %174 = vsyncadd [#allocation6], %s173
          %s175 = sshll.u32 [#allocation5], 4
          %s176 = int_to_ptr.vmem [resolvable:$true] %s175
          %181 = dma.hbm_to_vmem [thread:$0]  %s1, 2048, %s176, [#allocation6], 128, 128, 8
        $region16: #{tpu_custom_call.1} parent=11 // pred_fallthru
          _
        // Predicated region
        $region17: #{tpu_custom_call.1} parent=11 // pred_check
          %p182 = pneg %p86
        $region18: #{tpu_custom_call.1} parent=11 // pred_check_branch
          %184 = sbr.rel (%p182) target = $region20
        $region19: #{tpu_custom_call.1} parent=11 // pred_region
          _
        $region20: #{tpu_custom_call.1} parent=11 // pred_fallthru
          _
        // Predicated region
        $region21: #{tpu_custom_call.1} parent=11 // pred_check
          %p185 = pneg %p107
        $region22: #{tpu_custom_call.1} parent=11 // pred_check_branch
          %187 = sbr.rel (%p185) target = $region24
        $region23: #{tpu_custom_call.1} parent=11 // pred_region
          %s189 = ssub.s32 2048, 2048
          %190 = vsyncadd [#allocation6], %s189
          %s191 = sshll.u32 [#allocation7], 4
          %s192 = int_to_ptr.vmem [resolvable:$true] %s191
          %197 = dma.hbm_to_vmem [thread:$0]  %s3, 2048, %s192, [#allocation6], 128, 128, 8
        $region24: #{tpu_custom_call.1} parent=11 // pred_fallthru
          _
        // Predicated region
        $region25: #{tpu_custom_call.1} parent=11 // pred_check
          %p198 = pneg %p128
        $region26: #{tpu_custom_call.1} parent=11 // pred_check_branch
          %200 = sbr.rel (%p198) target = $region28
        $region27: #{tpu_custom_call.1} parent=11 // pred_region
          _
        $region28: #{tpu_custom_call.1} parent=11 // pred_fallthru
          _
      $region12: #{tpu_custom_call.1} parent=5 // pred_fallthru
        _
      %p201 = scmp.lt.s32.totalorder %s18, 2
      // Predicated region
      $region29: #{tpu_custom_call.1} parent=5 // pred_check
        %p202 = pneg %p201
      $region30: #{tpu_custom_call.1} parent=5 // pred_check_branch
        %204 = sbr.rel (%p202) target = $region32
      $region31: #{tpu_custom_call.1} parent=5 // pred_region
        // Predicated region
        $region33: #{tpu_custom_call.1} parent=31 // pred_check
          %p205 = pneg %p38
        $region34: #{tpu_custom_call.1} parent=31 // pred_check_branch
          %207 = sbr.rel (%p205) target = $region36
        $region35: #{tpu_custom_call.1} parent=31 // pred_region
          %s208 = sand.u32 %s28, 1
          %s209 = scalar_lea.sflag [#allocation3], %s208
          %s210 = sand.u32 %s28, 1
          %s211 = smul.addr %s210, 8
          %s212 = scalar_lea.vmem [#allocation2], %s211
          %s214 = ssub.s32 128, 128
          %215 = vsyncadd %s209, %s214
          %s216 = smul.addr %s18, 8
          %s217 = smul.addr %s216, 128
          %s218 = scalar_lea.hbm %s0, %s217
          %s220 = sshll.u32 %s212, 4
          %s221 = int_to_ptr.vmem [resolvable:$true] %s220
          %223 = dma.hbm_to_vmem [thread:$0]  %s218, 128, %s221, %s209
        $region36: #{tpu_custom_call.1} parent=31 // pred_fallthru
          _
      $region32: #{tpu_custom_call.1} parent=5 // pred_fallthru
        _
      %p224 = scmp.le.s32.totalorder 1, %s18
      %p225 = scmp.lt.s32.totalorder %s18, 3
      %p226 = pnand %p224, %p225
      %p227 = pneg %p226
      // Predicated region
      $region37: #{tpu_custom_call.1} parent=5 // pred_check
        _
      $region38: #{tpu_custom_call.1} parent=5 // pred_check_branch
        %229 = sbr.rel (%p226) target = $region40
      $region39: #{tpu_custom_call.1} parent=5 // pred_region
        %s230 = ssub.s32 %s18, 1
        %s231 = sand.u32 %s31, 1
        %s232 = scalar_lea.sflag [#allocation3], %s231
        %s233 = sand.u32 %s31, 1
        %s234 = smul.addr %s233, 8
        %s235 = scalar_lea.vmem [#allocation2], %s234
        // Predicated region
        $region41: #{tpu_custom_call.1} parent=39 // pred_check
          %p236 = pneg %p44
        $region42: #{tpu_custom_call.1} parent=39 // pred_check_branch
          %238 = sbr.rel (%p236) target = $region44
        $region43: #{tpu_custom_call.1} parent=39 // pred_region
          %239 = dma.done %s232, 128
        $region44: #{tpu_custom_call.1} parent=39 // pred_fallthru
          _
        // Predicated region
        $region45: #{tpu_custom_call.1} parent=39 // pred_check
          %p240 = pneg %p65
        $region46: #{tpu_custom_call.1} parent=39 // pred_check_branch
          %242 = sbr.rel (%p240) target = $region48
        $region47: #{tpu_custom_call.1} parent=39 // pred_region
          %243 = dma.done [#allocation6], 2048
        $region48: #{tpu_custom_call.1} parent=39 // pred_fallthru
          _
        // Predicated region
        $region49: #{tpu_custom_call.1} parent=39 // pred_check
          %p244 = pneg %p107
        $region50: #{tpu_custom_call.1} parent=39 // pred_check_branch
          %246 = sbr.rel (%p244) target = $region52
        $region51: #{tpu_custom_call.1} parent=39 // pred_region
          %247 = dma.done [#allocation6], 2048
        $region52: #{tpu_custom_call.1} parent=39 // pred_fallthru
          _
        %s248 = sand.u32 %s31, 1
        %s249 = scalar_lea.sflag [#allocation3], %s248
        %s250 = sand.u32 %s31, 1
        %s251 = smul.addr %s250, 8
        %s252 = scalar_lea.vmem [#allocation2], %s251
        %p253 = pneg %p44
        %p254 = pneg %p41
        %p255 = pneg %p65
        %p256 = pneg %p62
        %p257 = pneg %p86
        %p258 = pneg %p83
        %p259 = pneg %p107
        %p260 = pneg %p104
        %p261 = pneg %p128
        %p262 = pneg %p125
        %p263 = pneg %p154
        %p264 = pneg %p151
        %s265 = sand.u32 %s141, 1
        %s266 = scalar_lea.sflag [#allocation4], %s265
        %s267 = sand.u32 %s141, 1
        %s268 = smul.addr %s267, 8
        %s269 = scalar_lea.vmem [#allocation8], %s268
        %v270 = vld [vmem:[#allocation5] sm:$0xff]
        %v271 = vld [vmem:[#allocation5 + $0x8] sm:$0xff]
        %v272 = vld [vmem:[#allocation5 + $0x10] sm:$0xff]
        %v273 = vld [vmem:[#allocation5 + $0x18] sm:$0xff]
        %v274 = vld [vmem:[#allocation5 + $0x20] sm:$0xff]
        %v275 = vld [vmem:[#allocation5 + $0x28] sm:$0xff]
        %v276 = vld [vmem:[#allocation5 + $0x30] sm:$0xff]
        %v277 = vld [vmem:[#allocation5 + $0x38] sm:$0xff]
        %v278 = vld [vmem:[#allocation5 + $0x40] sm:$0xff]
        %v279 = vld [vmem:[#allocation5 + $0x48] sm:$0xff]
        %v280 = vld [vmem:[#allocation5 + $0x50] sm:$0xff]
        %v281 = vld [vmem:[#allocation5 + $0x58] sm:$0xff]
        %v282 = vld [vmem:[#allocation5 + $0x60] sm:$0xff]
        %v283 = vld [vmem:[#allocation5 + $0x68] sm:$0xff]
        %v284 = vld [vmem:[#allocation5 + $0x70] sm:$0xff]
        %v285 = vld [vmem:[#allocation5 + $0x78] sm:$0xff]
        %v286 = vld [vmem:[#allocation7] sm:$0xff]
        %v287 = vld [vmem:[#allocation7 + $0x8] sm:$0xff]
        %v288 = vld [vmem:[#allocation7 + $0x10] sm:$0xff]
        %v289 = vld [vmem:[#allocation7 + $0x18] sm:$0xff]
        %v290 = vld [vmem:[#allocation7 + $0x20] sm:$0xff]
        %v291 = vld [vmem:[#allocation7 + $0x28] sm:$0xff]
        %v292 = vld [vmem:[#allocation7 + $0x30] sm:$0xff]
        %v293 = vld [vmem:[#allocation7 + $0x38] sm:$0xff]
        %v294 = vld [vmem:[#allocation7 + $0x40] sm:$0xff]
        %v295 = vld [vmem:[#allocation7 + $0x48] sm:$0xff]
        %v296 = vld [vmem:[#allocation7 + $0x50] sm:$0xff]
        %v297 = vld [vmem:[#allocation7 + $0x58] sm:$0xff]
        %v298 = vld [vmem:[#allocation7 + $0x60] sm:$0xff]
        %v299 = vld [vmem:[#allocation7 + $0x68] sm:$0xff]
        %v300 = vld [vmem:[#allocation7 + $0x70] sm:$0xff]
        %v301 = vld [vmem:[#allocation7 + $0x78] sm:$0xff]
        %v302 = vld [vmem:[%s2] sm:$0x1]
        %v303 = vld [vmem:[%s4] sm:$0x1]
        %v304 = vld [vmem:[%s235] sm:$0xff]
        %v306 = vlaneseq
        %v307 = vshrl.u32 %v306, 7
        %v308 = vsub.s32 0, %v307
        %v309 = vrot.slane %v302, %v308
        %311 = vmatprep.subr.mxu0 0.0
        %312 = vmatpush1.msra.mxu0 %v270
        %313 = vmatprep.subr.mxu0 0.0
        %314 = vmatpush1.msra.mxu0 %v271
        %315 = vmatprep.subr.mxu0 0.0
        %316 = vmatpush1.msra.mxu0 %v272
        %317 = vmatprep.subr.mxu0 0.0
        %318 = vmatpush1.msra.mxu0 %v273
        %319 = vmatprep.subr.mxu0 0.0
        %320 = vmatpush1.msra.mxu0 %v274
        %321 = vmatprep.subr.mxu0 0.0
        %322 = vmatpush1.msra.mxu0 %v275
        %323 = vmatprep.subr.mxu0 0.0
        %324 = vmatpush1.msra.mxu0 %v276
        %325 = vmatprep.subr.mxu0 0.0
        %326 = vmatpush1.msra.mxu0 %v277
        %327 = vmatprep.subr.mxu0 0.0
        %328 = vmatpush1.msra.mxu0 %v278
        %329 = vmatprep.subr.mxu0 0.0
        %330 = vmatpush1.msra.mxu0 %v279
        %331 = vmatprep.subr.mxu0 0.0
        %332 = vmatpush1.msra.mxu0 %v280
        %333 = vmatprep.subr.mxu0 0.0
        %334 = vmatpush1.msra.mxu0 %v281
        %335 = vmatprep.subr.mxu0 0.0
        %336 = vmatpush1.msra.mxu0 %v282
        %337 = vmatprep.subr.mxu0 0.0
        %338 = vmatpush1.msra.mxu0 %v283
        %339 = vmatprep.subr.mxu0 0.0
        %340 = vmatpush1.msra.mxu0 %v284
        %341 = vmatprep.subr.mxu0 0.0
        %342 = vmatpush1.msra.mxu0 %v285
        %343 = vmatprep.subr.mxu0 0.0
        %344 = vmatpush1.msra.mxu0 0.0
        %345 = vmatprep.subr.mxu0 0.0
        %346 = vmatpush1.msra.mxu0 0.0
        %347 = vmatprep.subr.mxu0 0.0
        %348 = vmatpush1.msra.mxu0 0.0
        %349 = vmatprep.subr.mxu0 0.0
        %350 = vmatpush1.msra.mxu0 0.0
        %351 = vmatprep.subr.mxu0 0.0
        %352 = vmatpush1.msra.mxu0 0.0
        %353 = vmatprep.subr.mxu0 0.0
        %354 = vmatpush1.msra.mxu0 0.0
        %355 = vmatprep.subr.mxu0 0.0
        %356 = vmatpush1.msra.mxu0 0.0
        %357 = vmatprep.subr.mxu0 0.0
        %358 = vmatpush1.msra.mxu0 0.0
        %359 = vmatprep.subr.mxu0 0.0
        %360 = vmatpush1.msra.mxu0 0.0
        %361 = vmatprep.subr.mxu0 0.0
        %362 = vmatpush1.msra.mxu0 0.0
        %363 = vmatprep.subr.mxu0 0.0
        %364 = vmatpush1.msra.mxu0 0.0
        %365 = vmatprep.subr.mxu0 0.0
        %366 = vmatpush1.msra.mxu0 0.0
        %367 = vmatprep.subr.mxu0 0.0
        %368 = vmatpush1.msra.mxu0 0.0
        %369 = vmatprep.subr.mxu0 0.0
        %370 = vmatpush1.msra.mxu0 0.0
        %371 = vmatprep.subr.mxu0 0.0
        %372 = vmatpush1.msra.mxu0 0.0
        %373 = vmatprep.subr.mxu0 0.0
        %374 = vmatpush1.msra.mxu0 0.0
        %375 = vmatprep.mubr.f32.mxu0 0.0
        %376 = vmatmul.mubr.f32.gmra.mrb[0].mxu0 %v304
        %v377 = vpop.f32.mrb[0].mxu0
        %v378 = vadd.f32 %v309, %v377
        %v379 = vpop.f32.mrb[0].mxu0
        %380 = vdwg.mxu0
        %v381 = vtanh.pop %v378
        %v383 = vlaneseq
        %v384 = vshrl.u32 %v383, 7
        %v385 = vsub.s32 0, %v384
        %v386 = vrot.slane %v303, %v385
        %388 = vmatprep.subr.mxu0 0.0
        %389 = vmatpush1.msra.mxu0 %v286
        %390 = vmatprep.subr.mxu0 0.0
        %391 = vmatpush1.msra.mxu0 %v287
        %392 = vmatprep.subr.mxu0 0.0
        %393 = vmatpush1.msra.mxu0 %v288
        %394 = vmatprep.subr.mxu0 0.0
        %395 = vmatpush1.msra.mxu0 %v289
        %396 = vmatprep.subr.mxu0 0.0
        %397 = vmatpush1.msra.mxu0 %v290
        %398 = vmatprep.subr.mxu0 0.0
        %399 = vmatpush1.msra.mxu0 %v291
        %400 = vmatprep.subr.mxu0 0.0
        %401 = vmatpush1.msra.mxu0 %v292
        %402 = vmatprep.subr.mxu0 0.0
        %403 = vmatpush1.msra.mxu0 %v293
        %404 = vmatprep.subr.mxu0 0.0
        %405 = vmatpush1.msra.mxu0 %v294
        %406 = vmatprep.subr.mxu0 0.0
        %407 = vmatpush1.msra.mxu0 %v295
        %408 = vmatprep.subr.mxu0 0.0
        %409 = vmatpush1.msra.mxu0 %v296
        %410 = vmatprep.subr.mxu0 0.0
        %411 = vmatpush1.msra.mxu0 %v297
        %412 = vmatprep.subr.mxu0 0.0
        %413 = vmatpush1.msra.mxu0 %v298
        %414 = vmatprep.subr.mxu0 0.0
        %415 = vmatpush1.msra.mxu0 %v299
        %416 = vmatprep.subr.mxu0 0.0
        %417 = vmatpush1.msra.mxu0 %v300
        %418 = vmatprep.subr.mxu0 0.0
        %419 = vmatpush1.msra.mxu0 %v301
        %420 = vmatprep.subr.mxu0 0.0
        %421 = vmatpush1.msra.mxu0 0.0
        %422 = vmatprep.subr.mxu0 0.0
        %423 = vmatpush1.msra.mxu0 0.0
        %424 = vmatprep.subr.mxu0 0.0
        %425 = vmatpush1.msra.mxu0 0.0
        %426 = vmatprep.subr.mxu0 0.0
        %427 = vmatpush1.msra.mxu0 0.0
        %428 = vmatprep.subr.mxu0 0.0
        %429 = vmatpush1.msra.mxu0 0.0
        %430 = vmatprep.subr.mxu0 0.0
        %431 = vmatpush1.msra.mxu0 0.0
        %432 = vmatprep.subr.mxu0 0.0
        %433 = vmatpush1.msra.mxu0 0.0
        %434 = vmatprep.subr.mxu0 0.0
        %435 = vmatpush1.msra.mxu0 0.0
        %436 = vmatprep.subr.mxu0 0.0
        %437 = vmatpush1.msra.mxu0 0.0
        %438 = vmatprep.subr.mxu0 0.0
        %439 = vmatpush1.msra.mxu0 0.0
        %440 = vmatprep.subr.mxu0 0.0
        %441 = vmatpush1.msra.mxu0 0.0
        %442 = vmatprep.subr.mxu0 0.0
        %443 = vmatpush1.msra.mxu0 0.0
        %444 = vmatprep.subr.mxu0 0.0
        %445 = vmatpush1.msra.mxu0 0.0
        %446 = vmatprep.subr.mxu0 0.0
        %447 = vmatpush1.msra.mxu0 0.0
        %448 = vmatprep.subr.mxu0 0.0
        %449 = vmatpush1.msra.mxu0 0.0
        %450 = vmatprep.subr.mxu0 0.0
        %451 = vmatpush1.msra.mxu0 0.0
        %452 = vmatprep.mubr.f32.mxu0 0.0
        %453 = vmatmul.mubr.f32.gmra.mrb[0].mxu0 %v381
        %v454 = vpop.f32.mrb[0].mxu0
        %v455 = vadd.f32 %v386, %v454
        %v456 = vpop.f32.mrb[0].mxu0
        %457 = vdwg.mxu0
        %458 = vst [vmem:[%s269] sm:$0xff] %v455
        %s459 = sand.u32 %s141, 1
        %s460 = scalar_lea.sflag [#allocation4], %s459
        %s461 = sand.u32 %s141, 1
        %s462 = smul.addr %s461, 8
        %s463 = scalar_lea.vmem [#allocation8], %s462
        // Predicated region
        $region53: #{tpu_custom_call.1} parent=39 // pred_check
          %p464 = pneg %p151
        $region54: #{tpu_custom_call.1} parent=39 // pred_check_branch
          %466 = sbr.rel (%p464) target = $region56
        $region55: #{tpu_custom_call.1} parent=39 // pred_region
          %s468 = ssub.s32 128, 128
          %469 = vsyncadd %s460, %s468
          %s470 = smul.addr %s23, 128
          %s471 = scalar_lea.hbm %s5, %s470
          %s473 = sshll.u32 %s463, 4
          %s474 = int_to_ptr.vmem [resolvable:$true] %s473
          %476 = dma.vmem_to_hbm [thread:$0]  %s474, 128, %s471, %s460
        $region56: #{tpu_custom_call.1} parent=39 // pred_fallthru
          _
      $region40: #{tpu_custom_call.1} parent=5 // pred_fallthru
        _
      %p477 = scmp.le.s32.totalorder 2, %s18
      // Predicated region
      $region57: #{tpu_custom_call.1} parent=5 // pred_check
        %p478 = pneg %p477
      $region58: #{tpu_custom_call.1} parent=5 // pred_check_branch
        %480 = sbr.rel (%p478) target = $region60
      $region59: #{tpu_custom_call.1} parent=5 // pred_region
        %s481 = ssub.s32 %s18, 2
        // Predicated region
        $region61: #{tpu_custom_call.1} parent=59 // pred_check
          %p482 = pneg %p157
        $region62: #{tpu_custom_call.1} parent=59 // pred_check_branch
          %484 = sbr.rel (%p482) target = $region64
        $region63: #{tpu_custom_call.1} parent=59 // pred_region
          %s485 = sand.u32 %s142, 1
          %s486 = scalar_lea.sflag [#allocation4], %s485
          %s487 = sand.u32 %s142, 1
          %s488 = smul.addr %s487, 8
          %s489 = scalar_lea.vmem [#allocation8], %s488
          %490 = dma.done %s486, 128
        $region64: #{tpu_custom_call.1} parent=59 // pred_fallthru
          _
      $region60: #{tpu_custom_call.1} parent=5 // pred_fallthru
        _
    $region6: #{tpu_custom_call.1} parent=1 // loop_footer
      %s22 = sadd.s32 1, %s18
    $region7: #{tpu_custom_call.1} parent=1 // loop_footer_branch
      %17 = sbr.rel target = $region3
    $region8: #{tpu_custom_call.1} parent=1 // loop_exit
      _
    %491 = vsyncpa [#allocation3], 1
    %s492 = scalar_lea.sflag [#allocation3], 1
    %493 = vsyncpa %s492, 1
    %494 = vsyncpa [#allocation6], 1
    %495 = vsyncpa [#allocation4], 1
    %s496 = scalar_lea.sflag [#allocation4], 1
    %497 = vsyncpa %s496, 1

</llo_original>
